<compile_context>
chip_gen: v6e
topology: v6e:2x2x1
jax: 0.10.0
libtpu: 0.0.40
codegen_flags: <defaults>
</compile_context>

<pallas_src>
import jax
import jax.numpy as jnp
from jax.experimental import pallas as pl
from jax.experimental.pallas import tpu as pltpu

HIDDEN = 128
_NCONST = 8  # packed constant columns: [w1, b1, b2, w3, pad, pad, pad, pad]


def _mlp_kernel(x_ref, consts_ref, w2_ref, b3_ref, o_ref):
    x = x_ref[...]                                      # (1, tm), batch on lanes
    consts = consts_ref[...]                            # (128, 8) packed constants
    w1 = consts[:, 0:1]                                 # (128, 1)
    b1 = consts[:, 1:2]
    b2 = consts[:, 2:3]
    w3 = consts[:, 3:4]

    # Linear(1, 128): K=1 matmul == broadcast multiply-add on the VPU.
    h1 = jnp.maximum(w1 * x + b1, 0.0)                  # (128, tm)

    # Linear(128, 128): lane-dense, weight-stationary MXU matmul, f32 accum.
    # TODO(synk): optionally cast w2/h1 to bf16 here (~3x fewer MXU passes);
    # kept f32 so the output stays bit-close to the torch reference (1e-4 tol).
    h2 = jnp.dot(w2_ref[...], h1,
                 preferred_element_type=jnp.float32) + b2
    h2 = jnp.maximum(h2, 0.0)                           # (128, tm)

    # Linear(128, 1): off the MXU — VPU multiply + sublane (XLU) reduction.
    y = jnp.sum(w3 * h2, axis=0, keepdims=True) + b3_ref[0]   # (1, tm)
    o_ref[...] = y.astype(o_ref.dtype)


def _choose_tm(N, tm_max):
    """Pick the lane-tile size: big enough to amortize ~0.35us/step overhead,
    but keep >= 2 grid steps when possible so the 'parallel' axis can split
    across v7x's two TensorCores.  Always a multiple of 256 lanes."""
    target = max(256, pl.cdiv(N, 2))
    tm = min(tm_max, target)
    return ((tm + 255) // 256) * 256


def kernelnet_forward(t, params, *, tm_max=2048):
    """t: (N, 1) float32.  params: torch-layout (out, in) weights / column biases."""
    N, one = t.shape
    assert one == 1
    w1, b1, w2, b2, w3, b3 = (params[k] for k in
                              ("w1", "b1", "w2", "b2", "w3", "b3"))

    tm = _choose_tm(N, tm_max)
    n_tiles = pl.cdiv(N, tm)
    Np = n_tiles * tm

    # Transpose dataflow: batch -> lane axis.  Pad to a multiple of tm.
    x = t.reshape(1, N)
    if Np != N:
        x = jnp.pad(x, ((0, 0), (0, Np - N)))

    # Pack the per-channel constants into one lane slab (one DMA, one tile).
    consts = jnp.concatenate([w1, b1, b2, w3.T], axis=1)        # (128, 4)
    consts = jnp.pad(consts, ((0, 0), (0, _NCONST - consts.shape[1])))

    cost = pl.CostEstimate(
        flops=2 * HIDDEN * (HIDDEN + 2) * Np,
        transcendentals=0,
        bytes_accessed=4 * (2 * Np + HIDDEN * _NCONST + HIDDEN * HIDDEN + 1),
    )

    out = pl.pallas_call(
        _mlp_kernel,
        out_shape=jax.ShapeDtypeStruct((1, Np), jnp.float32),
        grid=(n_tiles,),
        in_specs=[
            pl.BlockSpec((1, tm), lambda i: (0, i)),             # x tile (lane-dense)
            pl.BlockSpec((HIDDEN, _NCONST), lambda i: (0, 0)),   # packed w1|b1|b2|w3
            pl.BlockSpec((HIDDEN, HIDDEN), lambda i: (0, 0)),    # w2 (128, 128)
            pl.BlockSpec(memory_space=pltpu.MemorySpace.SMEM),   # b3 scalar in SMEM
        ],
        out_specs=pl.BlockSpec((1, tm), lambda i: (0, i)),
        compiler_params=pltpu.CompilerParams(
            dimension_semantics=("parallel",),
            vmem_limit_bytes=32 * 1024 * 1024,
        ),
        cost_estimate=cost,
    )(x, consts, w2, b3)

    return out.reshape(Np, 1)[:N]


def init_params(key):
    """Deterministic init; torch nn.Linear layout: W (out, in), column biases."""
    k1, k2, k3, k4, k5, k6 = jax.random.split(key, 6)

    def lin(kw, kb, fan_in, fan_out):
        bound = 1.0 / jnp.sqrt(fan_in)
        w = jax.random.uniform(kw, (fan_out, fan_in), jnp.float32, -bound, bound)
        b = jax.random.uniform(kb, (fan_out, 1), jnp.float32, -bound, bound)
        return w, b

    w1, b1 = lin(k1, k2, 1, HIDDEN)
    w2, b2 = lin(k3, k4, HIDDEN, HIDDEN)
    w3, b3 = lin(k5, k6, HIDDEN, 1)
    return dict(w1=w1, b1=b1, w2=w2, b2=b2, w3=w3, b3=b3.reshape(1))


def _reference(t, p):
    h1 = jnp.maximum(t @ p["w1"].T + p["b1"].T, 0.0)
    h2 = jnp.maximum(h1 @ p["w2"].T + p["b2"].T, 0.0)
    return h2 @ p["w3"].T + p["b3"]


if __name__ == "__main__":
    key = jax.random.PRNGKey(0)
    kp, kt = jax.random.split(key)
    params = init_params(kp)

    N = 1024                                  # batch of time points -> 2 grid tiles
    t = jax.random.uniform(kt, (N, 1), jnp.float32)

    out = kernelnet_forward(t, params)
    out = jax.block_until_ready(out)

    ref = _reference(t, params)
    assert out.shape == (N, 1)
    assert jnp.allclose(out, ref, atol=1e-4, rtol=1e-4), \
        float(jnp.max(jnp.abs(out - ref)))
    print("KERNEL_OK")
</pallas_src>

<mosaic_0001>
module attributes {stable_mosaic.version = 11 : i64} {
  func.func @_mlp_kernel(%arg0: i32, %arg1: memref<1x512xf32, #tpu.memory_space<vmem>>, %arg2: memref<128x8xf32, #tpu.memory_space<vmem>>, %arg3: memref<128x128xf32, #tpu.memory_space<vmem>>, %arg4: memref<1xf32, #tpu.memory_space<smem>>, %arg5: memref<1x512xf32, #tpu.memory_space<vmem>>) attributes {dimension_semantics = [#tpu.dimension_semantics<parallel>], iteration_bounds = array<i64: 2>, scalar_prefetch = 0 : i64, scratch_operands = 0 : i64, tpu.core_type = #tpu.core_type<tc>, window_params = [{transform_indices = @transform_0, window_bounds = array<i64: 1, 512>}, {pipeline_mode = #tpu.pipeline_mode<synchronous>, transform_indices = @transform_1, window_bounds = array<i64: 128, 8>}, {pipeline_mode = #tpu.pipeline_mode<synchronous>, transform_indices = @transform_2, window_bounds = array<i64: 128, 128>}, {transform_indices = @transform_3, window_bounds = array<i64: 1>}, {transform_indices = @transform_4, window_bounds = array<i64: 1, 512>}]} {
    %c0 = arith.constant 0 : index
    %c0_0 = arith.constant 0 : index
    %0 = vector.load %arg1[%c0, %c0_0] : memref<1x512xf32, #tpu.memory_space<vmem>>, vector<1x512xf32>
    %c0_1 = arith.constant 0 : index
    %c0_2 = arith.constant 0 : index
    %1 = vector.load %arg2[%c0_1, %c0_2] : memref<128x8xf32, #tpu.memory_space<vmem>>, vector<128x8xf32>
    %2 = vector.extract_strided_slice %1 {offsets = [0, 0], sizes = [128, 1], strides = [1, 1]} : vector<128x8xf32> to vector<128x1xf32>
    %3 = vector.extract_strided_slice %1 {offsets = [0, 1], sizes = [128, 1], strides = [1, 1]} : vector<128x8xf32> to vector<128x1xf32>
    %4 = vector.extract_strided_slice %1 {offsets = [0, 2], sizes = [128, 1], strides = [1, 1]} : vector<128x8xf32> to vector<128x1xf32>
    %5 = vector.extract_strided_slice %1 {offsets = [0, 3], sizes = [128, 1], strides = [1, 1]} : vector<128x8xf32> to vector<128x1xf32>
    %6 = vector.broadcast %2 : vector<128x1xf32> to vector<128x512xf32>
    %7 = vector.broadcast %0 : vector<1x512xf32> to vector<128x512xf32>
    %8 = arith.mulf %6, %7 : vector<128x512xf32>
    %9 = vector.broadcast %3 : vector<128x1xf32> to vector<128x512xf32>
    %10 = arith.addf %8, %9 : vector<128x512xf32>
    %cst = arith.constant 0.000000e+00 : f32
    %11 = vector.broadcast %cst : f32 to vector<128x512xf32>
    %12 = arith.maximumf %10, %11 : vector<128x512xf32>
    %c0_3 = arith.constant 0 : index
    %c0_4 = arith.constant 0 : index
    %13 = vector.load %arg3[%c0_3, %c0_4] : memref<128x128xf32, #tpu.memory_space<vmem>>, vector<128x128xf32>
    %cst_5 = arith.constant dense<0.000000e+00> : vector<128x512xf32>
    %14 = tpu.matmul %13, %12, %cst_5 {dimension_numbers = #tpu.dot_dimension_numbers<[1], [0], [0], [1], [0, 0, 1, 1], [], []>} : vector<128x128xf32>, vector<128x512xf32>, vector<128x512xf32> -> vector<128x512xf32>
    %15 = vector.broadcast %4 : vector<128x1xf32> to vector<128x512xf32>
    %16 = arith.addf %14, %15 : vector<128x512xf32>
    %cst_6 = arith.constant 0.000000e+00 : f32
    %17 = vector.broadcast %cst_6 : f32 to vector<128x512xf32>
    %18 = arith.maximumf %16, %17 : vector<128x512xf32>
    %19 = vector.broadcast %5 : vector<128x1xf32> to vector<128x512xf32>
    %20 = arith.mulf %19, %18 : vector<128x512xf32>
    %cst_7 = arith.constant dense<0.000000e+00> : vector<512xf32>
    %21 = vector.multi_reduction <add>, %20, %cst_7 [0] : vector<128x512xf32> to vector<512xf32>
    %22 = vector.shape_cast %21 : vector<512xf32> to vector<1x512xf32>
    %c0_8 = arith.constant 0 : index
    %23 = memref.load %arg4[%c0_8] : memref<1xf32, #tpu.memory_space<smem>>
    %24 = vector.broadcast %23 : f32 to vector<1x512xf32>
    %25 = arith.addf %22, %24 : vector<1x512xf32>
    %c0_9 = arith.constant 0 : index
    %c0_10 = arith.constant 0 : index
    %26 = vector.load %arg5[%c0_9, %c0_10] : memref<1x512xf32, #tpu.memory_space<vmem>>, vector<1x512xf32>
    tpu.vector_store %arg5[%c0_9, %c0_10], %25 {strides = array<i32>} : memref<1x512xf32, #tpu.memory_space<vmem>>, vector<1x512xf32>,
    return
  }
  func.func @transform_0(%arg0: i32) -> (i32, i32) {
    %c0_i32 = arith.constant 0 : i32
    %c0_i32_0 = arith.constant 0 : i32
    return %c0_i32, %arg0 : i32, i32
  }
  func.func @transform_1(%arg0: i32) -> (i32, i32) {
    %c0_i32 = arith.constant 0 : i32
    %c0_i32_0 = arith.constant 0 : i32
    %c0_i32_1 = arith.constant 0 : i32
    return %c0_i32, %c0_i32_0 : i32, i32
  }
  func.func @transform_2(%arg0: i32) -> (i32, i32) {
    %c0_i32 = arith.constant 0 : i32
    %c0_i32_0 = arith.constant 0 : i32
    %c0_i32_1 = arith.constant 0 : i32
    return %c0_i32, %c0_i32_0 : i32, i32
  }
  func.func @transform_3(%arg0: i32) -> i32 {
    %c0_i32 = arith.constant 0 : i32
    %c0_i32_0 = arith.constant 0 : i32
    return %c0_i32 : i32
  }
  func.func @transform_4(%arg0: i32) -> (i32, i32) {
    %c0_i32 = arith.constant 0 : i32
    %c0_i32_0 = arith.constant 0 : i32
    return %c0_i32, %arg0 : i32, i32
  }
}

</mosaic_0001>

<llo_original>
// kernel: tpu_custom_call.1
$region0: #{tpu_custom_call.1}
  #allocation0 [shape = 'u32[]', space=smem, size = 0x4, offset = 0x4, fixed_abs, tag = 'smem constant byte address 0x4 - core index']
  #allocation1 [shape = 'u32[144,128]{1,0:T(1,128)}', space=vmem, size = 0x12000, scoped, tag = 'internal scratch']
  #allocation2 [shape = 'f32[1]{0:T(128)S(6)}', space=smem, size = 0x200, scoped, tag = 'scoped memory for tpu_custom_call.1']
  %s0 = inlined_call_operand.vmem [shape: f32[1,1024], index: 0, kind: input, shape index: {}]
  %s1 = inlined_call_operand.vmem [shape: f32[128,8], index: 1, kind: input, shape index: {}]
  %s2 = inlined_call_operand.vmem [shape: f32[128,128], index: 2, kind: input, shape index: {}]
  %s3 = inlined_call_operand.<no memory space> [shape: f32[1], index: 3, kind: input, shape index: {}]
  %s4 = inlined_call_operand.hbm [shape: f32[1,1024], index: 4, kind: output, shape index: {}]
  %s5 = sld [smem:[#allocation0]]
  $region49: #{tpu_custom_call.1} parent=0
    _
  %s7 = ssub.s32 1, %s5
  %s8 = scalar_select 0, %s7, %s5
  %9 = sst [smem:[#allocation2]] %s3
  $region1: #{tpu_custom_call.1} parent=0
    #allocation3 [shape = 'u8[4096]{0}', space=vmem, size = 0x1000, scoped, tag = 'output window, operand 0']
    #allocation4 [shape = 's32[2]{0}', space=sflag, size = 0x8, scoped, tag = 'scoped memory for tpu_custom_call.1']
    %10 = vsyncpa [#allocation4], 0
    %s11 = scalar_lea.sflag [#allocation4], 1
    %12 = vsyncpa %s11, 0
    loop: start=0, step=1, limit=4
    $region2: #{tpu_custom_call.1} parent=1 // loop_pre_header
      _
    $region3: #{tpu_custom_call.1} parent=1 // loop_header
      %s14 = sphi 0, %s18
      %p15 = scmp.ge.s32.totalorder %s14, 4
      %s24 = sphi 0, %s26
      %s27 = sphi 0, %s24
      %s28 = sphi 0, %s27
      %s44 = sphi 0, %s28
      %s48 = sphi 0, %s48
      %s50 = sphi 0, %s48
      %s51 = sphi 0, %s50
      %s65 = sphi 0, %s51
      %s69 = sphi 0, %s69
      %s71 = sphi 0, %s69
      %s72 = sphi 0, %s71
      %s86 = sphi 0, %s72
      %s90 = sphi 0, %s90
      %s92 = sphi 0, %s90
      %s93 = sphi 0, %s92
      %s107 = sphi 0, %s93
      %s113 = sphi 0, %s115
      %s116 = sphi 0, %s113
      %s117 = sphi 0, %s116
      %s133 = sphi 0, %s117
    $region4: #{tpu_custom_call.1} parent=1 // loop_header_branch
      %17 = sbr.rel (%p15) target = $region8
    $region5: #{tpu_custom_call.1} parent=1 // loop_body
      %s19 = ssub.s32 %s14, 1
      %s20 = ssub.s32 %s14, 2
      %s21 = sadd.s32 %s14, 1
      %s22 = ssub.s32 %s14, %s21
      %p23 = scmp.eq.s32.totalorder %s22, 0
      %s25 = sadd.s32 %s24, 1
      %s26 = scalar_select %p23, %s24, %s25
      %p29 = pneg %p23
      %p30 = scmp.eq.s32.totalorder %s14, 1
      %p31 = por %p29, %p30
      %p32 = scmp.ne.s32.totalorder %s24, %s27
      %p33 = scmp.eq.s32.totalorder %s14, 0
      %p34 = por %p32, %p33
      %p35 = scmp.ne.s32.totalorder %s24, %s27
      %p36 = scmp.eq.s32.totalorder %s19, 1
      %p37 = por %p35, %p36
      %p38 = scmp.ne.s32.totalorder %s27, %s28
      %p39 = scmp.eq.s32.totalorder %s19, 0
      %p40 = por %p38, %p39
      %p41 = scmp.ne.s32.totalorder %s27, %s28
      %p42 = scmp.eq.s32.totalorder %s20, 1
      %p43 = por %p41, %p42
      %p45 = scmp.ne.s32.totalorder %s28, %s44
      %p46 = scmp.eq.s32.totalorder %s20, 0
      %p47 = por %p45, %p46
      %s49 = sadd.s32 %s48, 1
      %p52 = scmp.eq.s32.totalorder %s14, 1
      %p53 = scmp.ne.s32.totalorder %s48, %s50
      %p54 = scmp.eq.s32.totalorder %s14, 0
      %p55 = por %p53, %p54
      %p56 = scmp.ne.s32.totalorder %s48, %s50
      %p57 = scmp.eq.s32.totalorder %s19, 1
      %p58 = por %p56, %p57
      %p59 = scmp.ne.s32.totalorder %s50, %s51
      %p60 = scmp.eq.s32.totalorder %s19, 0
      %p61 = por %p59, %p60
      %p62 = scmp.ne.s32.totalorder %s50, %s51
      %p63 = scmp.eq.s32.totalorder %s20, 1
      %p64 = por %p62, %p63
      %p66 = scmp.ne.s32.totalorder %s51, %s65
      %p67 = scmp.eq.s32.totalorder %s20, 0
      %p68 = por %p66, %p67
      %s70 = sadd.s32 %s69, 1
      %p73 = scmp.eq.s32.totalorder %s14, 1
      %p74 = scmp.ne.s32.totalorder %s69, %s71
      %p75 = scmp.eq.s32.totalorder %s14, 0
      %p76 = por %p74, %p75
      %p77 = scmp.ne.s32.totalorder %s69, %s71
      %p78 = scmp.eq.s32.totalorder %s19, 1
      %p79 = por %p77, %p78
      %p80 = scmp.ne.s32.totalorder %s71, %s72
      %p81 = scmp.eq.s32.totalorder %s19, 0
      %p82 = por %p80, %p81
      %p83 = scmp.ne.s32.totalorder %s71, %s72
      %p84 = scmp.eq.s32.totalorder %s20, 1
      %p85 = por %p83, %p84
      %p87 = scmp.ne.s32.totalorder %s72, %s86
      %p88 = scmp.eq.s32.totalorder %s20, 0
      %p89 = por %p87, %p88
      %s91 = sadd.s32 %s90, 1
      %p94 = scmp.eq.s32.totalorder %s14, 1
      %p95 = scmp.ne.s32.totalorder %s90, %s92
      %p96 = scmp.eq.s32.totalorder %s14, 0
      %p97 = por %p95, %p96
      %p98 = scmp.ne.s32.totalorder %s90, %s92
      %p99 = scmp.eq.s32.totalorder %s19, 1
      %p100 = por %p98, %p99
      %p101 = scmp.ne.s32.totalorder %s92, %s93
      %p102 = scmp.eq.s32.totalorder %s19, 0
      %p103 = por %p101, %p102
      %p104 = scmp.ne.s32.totalorder %s92, %s93
      %p105 = scmp.eq.s32.totalorder %s20, 1
      %p106 = por %p104, %p105
      %p108 = scmp.ne.s32.totalorder %s93, %s107
      %p109 = scmp.eq.s32.totalorder %s20, 0
      %p110 = por %p108, %p109
      %s111 = ssub.s32 %s14, %s21
      %p112 = scmp.eq.s32.totalorder %s111, 0
      %s114 = sadd.s32 %s113, 1
      %s115 = scalar_select %p112, %s113, %s114
      %p118 = pneg %p112
      %p119 = scmp.eq.s32.totalorder %s14, 1
      %p120 = por %p118, %p119
      %p121 = scmp.ne.s32.totalorder %s113, %s116
      %p122 = scmp.eq.s32.totalorder %s14, 0
      %p123 = por %p121, %p122
      %p124 = scmp.ne.s32.totalorder %s113, %s116
      %p125 = scmp.eq.s32.totalorder %s19, 1
      %p126 = por %p124, %p125
      %p127 = scmp.ne.s32.totalorder %s116, %s117
      %p128 = scmp.eq.s32.totalorder %s19, 0
      %p129 = por %p127, %p128
      %p130 = scmp.ne.s32.totalorder %s116, %s117
      %p131 = scmp.eq.s32.totalorder %s20, 1
      %p132 = por %p130, %p131
      %p134 = scmp.ne.s32.totalorder %s117, %s133
      %p135 = scmp.eq.s32.totalorder %s20, 0
      %p136 = por %p134, %p135
      %p137 = scmp.le.s32.totalorder 1, %s14
      %p138 = scmp.lt.s32.totalorder %s14, 3
      %p139 = pnand %p137, %p138
      %p140 = pneg %p139
      // Predicated region
      $region9: #{tpu_custom_call.1} parent=5 // pred_check
        _
      $region10: #{tpu_custom_call.1} parent=5 // pred_check_branch
        %142 = sbr.rel (%p139) target = $region12
      $region11: #{tpu_custom_call.1} parent=5 // pred_region
        %s143 = ssub.s32 %s14, 1
        // Predicated region
        $region13: #{tpu_custom_call.1} parent=11 // pred_check
          %p144 = pneg %p61
        $region14: #{tpu_custom_call.1} parent=11 // pred_check_branch
          %146 = sbr.rel (%p144) target = $region16
        $region15: #{tpu_custom_call.1} parent=11 // pred_region
          _
        $region16: #{tpu_custom_call.1} parent=11 // pred_fallthru
          _
        // Predicated region
        $region17: #{tpu_custom_call.1} parent=11 // pred_check
          %p147 = pneg %p82
        $region18: #{tpu_custom_call.1} parent=11 // pred_check_branch
          %149 = sbr.rel (%p147) target = $region20
        $region19: #{tpu_custom_call.1} parent=11 // pred_region
          _
        $region20: #{tpu_custom_call.1} parent=11 // pred_fallthru
          _
        // Predicated region
        $region21: #{tpu_custom_call.1} parent=11 // pred_check
          %p150 = pneg %p103
        $region22: #{tpu_custom_call.1} parent=11 // pred_check_branch
          %152 = sbr.rel (%p150) target = $region24
        $region23: #{tpu_custom_call.1} parent=11 // pred_region
          _
        $region24: #{tpu_custom_call.1} parent=11 // pred_fallthru
          _
      $region12: #{tpu_custom_call.1} parent=5 // pred_fallthru
        _
      %p153 = scmp.lt.s32.totalorder %s14, 2
      // Predicated region
      $region25: #{tpu_custom_call.1} parent=5 // pred_check
        %p154 = pneg %p153
      $region26: #{tpu_custom_call.1} parent=5 // pred_check_branch
        %156 = sbr.rel (%p154) target = $region28
      $region27: #{tpu_custom_call.1} parent=5 // pred_region
        // Predicated region
        $region29: #{tpu_custom_call.1} parent=27 // pred_check
          %p157 = pneg %p34
        $region30: #{tpu_custom_call.1} parent=27 // pred_check_branch
          %159 = sbr.rel (%p157) target = $region32
        $region31: #{tpu_custom_call.1} parent=27 // pred_region
          %s160 = smul.u32 4, %s14
          %p161 = scmp.lt.s32.totalorder %s160, 7
          %s162 = scalar_select %p161, %s160, 7
          %s163 = scalar_lea.vmem %s0, %s162
          %s164 = smul.u32 4, %s14
        $region32: #{tpu_custom_call.1} parent=27 // pred_fallthru
          _
      $region28: #{tpu_custom_call.1} parent=5 // pred_fallthru
        _
      %p165 = scmp.le.s32.totalorder 1, %s14
      %p166 = scmp.lt.s32.totalorder %s14, 3
      %p167 = pnand %p165, %p166
      %p168 = pneg %p167
      // Predicated region
      $region33: #{tpu_custom_call.1} parent=5 // pred_check
        _
      $region34: #{tpu_custom_call.1} parent=5 // pred_check_branch
        %170 = sbr.rel (%p167) target = $region36
      $region35: #{tpu_custom_call.1} parent=5 // pred_region
        %s171 = ssub.s32 %s14, 1
        %s172 = smul.u32 4, %s19
        %p173 = scmp.lt.s32.totalorder %s172, 7
        %s174 = scalar_select %p173, %s172, 7
        %s175 = scalar_lea.vmem %s0, %s174
        %p176 = pneg %p40
        %p177 = pneg %p37
        %p178 = pneg %p61
        %p179 = pneg %p58
        %p180 = pneg %p82
        %p181 = pneg %p79
        %p182 = pneg %p103
        %p183 = pneg %p100
        %p184 = pneg %p129
        %p185 = pneg %p126
        %s186 = sand.u32 %s116, 1
        %s187 = scalar_lea.sflag [#allocation4], %s186
        %s188 = sand.u32 %s116, 1
        %s189 = smul.addr %s188, 4
        %s190 = scalar_lea.vmem [#allocation3], %s189
        %s191 = smul.u32 4, %s19
        %p192 = scmp.lt.s32.totalorder %s191, 7
        %s193 = scalar_select %p192, %s191, 7
        %s194 = scalar_lea.vmem %s0, %s193
        %s195 = smul.u32 4, %s19
        %s196 = smul.u32 4, %s19
        %v197 = vld [vmem:[%s194] sm:$0xf]
        %v198 = vld [vmem:[%s1] sm:$0xff]
        %v199 = vld [vmem:[%s1 + $0x8] sm:$0xff]
        %v200 = vld [vmem:[%s1 + $0x10] sm:$0xff]
        %v201 = vld [vmem:[%s1 + $0x18] sm:$0xff]
        %v202 = vld [vmem:[%s1 + $0x20] sm:$0xff]
        %v203 = vld [vmem:[%s1 + $0x28] sm:$0xff]
        %v204 = vld [vmem:[%s1 + $0x30] sm:$0xff]
        %v205 = vld [vmem:[%s1 + $0x38] sm:$0xff]
        %v206 = vld [vmem:[%s1 + $0x40] sm:$0xff]
        %v207 = vld [vmem:[%s1 + $0x48] sm:$0xff]
        %v208 = vld [vmem:[%s1 + $0x50] sm:$0xff]
        %v209 = vld [vmem:[%s1 + $0x58] sm:$0xff]
        %v210 = vld [vmem:[%s1 + $0x60] sm:$0xff]
        %v211 = vld [vmem:[%s1 + $0x68] sm:$0xff]
        %v212 = vld [vmem:[%s1 + $0x70] sm:$0xff]
        %v213 = vld [vmem:[%s1 + $0x78] sm:$0xff]
        %215 = vset.pattern.permute.xlu0 0
        %216 = vperm.xlu0 %215, %v198
        %v217 = vpop.permute.xlu0 %216
        %220 = vset.pattern.permute.xlu0 0
        %221 = vperm.xlu0 %220, %v199
        %v222 = vpop.permute.xlu0 %221
        %225 = vset.pattern.permute.xlu0 0
        %226 = vperm.xlu0 %225, %v200
        %v227 = vpop.permute.xlu0 %226
        %230 = vset.pattern.permute.xlu0 0
        %231 = vperm.xlu0 %230, %v201
        %v232 = vpop.permute.xlu0 %231
        %235 = vset.pattern.permute.xlu0 0
        %236 = vperm.xlu0 %235, %v202
        %v237 = vpop.permute.xlu0 %236
        %240 = vset.pattern.permute.xlu0 0
        %241 = vperm.xlu0 %240, %v203
        %v242 = vpop.permute.xlu0 %241
        %245 = vset.pattern.permute.xlu0 0
        %246 = vperm.xlu0 %245, %v204
        %v247 = vpop.permute.xlu0 %246
        %250 = vset.pattern.permute.xlu0 0
        %251 = vperm.xlu0 %250, %v205
        %v252 = vpop.permute.xlu0 %251
        %255 = vset.pattern.permute.xlu0 0
        %256 = vperm.xlu0 %255, %v206
        %v257 = vpop.permute.xlu0 %256
        %260 = vset.pattern.permute.xlu0 0
        %261 = vperm.xlu0 %260, %v207
        %v262 = vpop.permute.xlu0 %261
        %265 = vset.pattern.permute.xlu0 0
        %266 = vperm.xlu0 %265, %v208
        %v267 = vpop.permute.xlu0 %266
        %270 = vset.pattern.permute.xlu0 0
        %271 = vperm.xlu0 %270, %v209
        %v272 = vpop.permute.xlu0 %271
        %275 = vset.pattern.permute.xlu0 0
        %276 = vperm.xlu0 %275, %v210
        %v277 = vpop.permute.xlu0 %276
        %280 = vset.pattern.permute.xlu0 0
        %281 = vperm.xlu0 %280, %v211
        %v282 = vpop.permute.xlu0 %281
        %285 = vset.pattern.permute.xlu0 0
        %286 = vperm.xlu0 %285, %v212
        %v287 = vpop.permute.xlu0 %286
        %290 = vset.pattern.permute.xlu0 0
        %291 = vperm.xlu0 %290, %v213
        %v292 = vpop.permute.xlu0 %291
        %v295 = vlaneseq
        %v296 = vshrl.u32 %v295, 7
        %v297 = vsub.s32 0, %v296
        %v298 = vrot.slane %v197, %v297
        %v299 = vlaneseq
        %v300 = vshrl.u32 %v299, 7
        %v301 = vsub.s32 1, %v300
        %v302 = vrot.slane %v197, %v301
        %v303 = vlaneseq
        %v304 = vshrl.u32 %v303, 7
        %v305 = vsub.s32 2, %v304
        %v306 = vrot.slane %v197, %v305
        %v307 = vlaneseq
        %v308 = vshrl.u32 %v307, 7
        %v309 = vsub.s32 3, %v308
        %v310 = vrot.slane %v197, %v309
        %v315 = vmul.f32 %v217, %v298
        %v316 = vmul.f32 %v217, %v302
        %v317 = vmul.f32 %v217, %v306
        %v318 = vmul.f32 %v217, %v310
        %v319 = vmul.f32 %v222, %v298
        %v320 = vmul.f32 %v222, %v302
        %v321 = vmul.f32 %v222, %v306
        %v322 = vmul.f32 %v222, %v310
        %v323 = vmul.f32 %v227, %v298
        %v324 = vmul.f32 %v227, %v302
        %v325 = vmul.f32 %v227, %v306
        %v326 = vmul.f32 %v227, %v310
        %v327 = vmul.f32 %v232, %v298
        %v328 = vmul.f32 %v232, %v302
        %v329 = vmul.f32 %v232, %v306
        %v330 = vmul.f32 %v232, %v310
        %v331 = vmul.f32 %v237, %v298
        %v332 = vmul.f32 %v237, %v302
        %v333 = vmul.f32 %v237, %v306
        %v334 = vmul.f32 %v237, %v310
        %v335 = vmul.f32 %v242, %v298
        %v336 = vmul.f32 %v242, %v302
        %v337 = vmul.f32 %v242, %v306
        %v338 = vmul.f32 %v242, %v310
        %v339 = vmul.f32 %v247, %v298
        %v340 = vmul.f32 %v247, %v302
        %v341 = vmul.f32 %v247, %v306
        %v342 = vmul.f32 %v247, %v310
        %v343 = vmul.f32 %v252, %v298
        %v344 = vmul.f32 %v252, %v302
        %v345 = vmul.f32 %v252, %v306
        %v346 = vmul.f32 %v252, %v310
        %v347 = vmul.f32 %v257, %v298
        %v348 = vmul.f32 %v257, %v302
        %v349 = vmul.f32 %v257, %v306
        %v350 = vmul.f32 %v257, %v310
        %v351 = vmul.f32 %v262, %v298
        %v352 = vmul.f32 %v262, %v302
        %v353 = vmul.f32 %v262, %v306
        %v354 = vmul.f32 %v262, %v310
        %v355 = vmul.f32 %v267, %v298
        %v356 = vmul.f32 %v267, %v302
        %v357 = vmul.f32 %v267, %v306
        %v358 = vmul.f32 %v267, %v310
        %v359 = vmul.f32 %v272, %v298
        %v360 = vmul.f32 %v272, %v302
        %v361 = vmul.f32 %v272, %v306
        %v362 = vmul.f32 %v272, %v310
        %v363 = vmul.f32 %v277, %v298
        %v364 = vmul.f32 %v277, %v302
        %v365 = vmul.f32 %v277, %v306
        %v366 = vmul.f32 %v277, %v310
        %v367 = vmul.f32 %v282, %v298
        %v368 = vmul.f32 %v282, %v302
        %v369 = vmul.f32 %v282, %v306
        %v370 = vmul.f32 %v282, %v310
        %v371 = vmul.f32 %v287, %v298
        %v372 = vmul.f32 %v287, %v302
        %v373 = vmul.f32 %v287, %v306
        %v374 = vmul.f32 %v287, %v310
        %v375 = vmul.f32 %v292, %v298
        %v376 = vmul.f32 %v292, %v302
        %v377 = vmul.f32 %v292, %v306
        %v378 = vmul.f32 %v292, %v310
        %379 = vset.pattern.permute.xlu0 1
        %380 = vperm.xlu0 %379, %v198
        %v381 = vpop.permute.xlu0 %380
        %383 = vset.pattern.permute.xlu0 1
        %384 = vperm.xlu0 %383, %v199
        %v385 = vpop.permute.xlu0 %384
        %387 = vset.pattern.permute.xlu0 1
        %388 = vperm.xlu0 %387, %v200
        %v389 = vpop.permute.xlu0 %388
        %391 = vset.pattern.permute.xlu0 1
        %392 = vperm.xlu0 %391, %v201
        %v393 = vpop.permute.xlu0 %392
        %395 = vset.pattern.permute.xlu0 1
        %396 = vperm.xlu0 %395, %v202
        %v397 = vpop.permute.xlu0 %396
        %399 = vset.pattern.permute.xlu0 1
        %400 = vperm.xlu0 %399, %v203
        %v401 = vpop.permute.xlu0 %400
        %403 = vset.pattern.permute.xlu0 1
        %404 = vperm.xlu0 %403, %v204
        %v405 = vpop.permute.xlu0 %404
        %407 = vset.pattern.permute.xlu0 1
        %408 = vperm.xlu0 %407, %v205
        %v409 = vpop.permute.xlu0 %408
        %411 = vset.pattern.permute.xlu0 1
        %412 = vperm.xlu0 %411, %v206
        %v413 = vpop.permute.xlu0 %412
        %415 = vset.pattern.permute.xlu0 1
        %416 = vperm.xlu0 %415, %v207
        %v417 = vpop.permute.xlu0 %416
        %419 = vset.pattern.permute.xlu0 1
        %420 = vperm.xlu0 %419, %v208
        %v421 = vpop.permute.xlu0 %420
        %423 = vset.pattern.permute.xlu0 1
        %424 = vperm.xlu0 %423, %v209
        %v425 = vpop.permute.xlu0 %424
        %427 = vset.pattern.permute.xlu0 1
        %428 = vperm.xlu0 %427, %v210
        %v429 = vpop.permute.xlu0 %428
        %431 = vset.pattern.permute.xlu0 1
        %432 = vperm.xlu0 %431, %v211
        %v433 = vpop.permute.xlu0 %432
        %435 = vset.pattern.permute.xlu0 1
        %436 = vperm.xlu0 %435, %v212
        %v437 = vpop.permute.xlu0 %436
        %439 = vset.pattern.permute.xlu0 1
        %440 = vperm.xlu0 %439, %v213
        %v441 = vpop.permute.xlu0 %440
        %v443 = vadd.f32 %v315, %v381
        %v444 = vadd.f32 %v316, %v381
        %v445 = vadd.f32 %v317, %v381
        %v446 = vadd.f32 %v318, %v381
        %v447 = vadd.f32 %v319, %v385
        %v448 = vadd.f32 %v320, %v385
        %v449 = vadd.f32 %v321, %v385
        %v450 = vadd.f32 %v322, %v385
        %v451 = vadd.f32 %v323, %v389
        %v452 = vadd.f32 %v324, %v389
        %v453 = vadd.f32 %v325, %v389
        %v454 = vadd.f32 %v326, %v389
        %v455 = vadd.f32 %v327, %v393
        %v456 = vadd.f32 %v328, %v393
        %v457 = vadd.f32 %v329, %v393
        %v458 = vadd.f32 %v330, %v393
        %v459 = vadd.f32 %v331, %v397
        %v460 = vadd.f32 %v332, %v397
        %v461 = vadd.f32 %v333, %v397
        %v462 = vadd.f32 %v334, %v397
        %v463 = vadd.f32 %v335, %v401
        %v464 = vadd.f32 %v336, %v401
        %v465 = vadd.f32 %v337, %v401
        %v466 = vadd.f32 %v338, %v401
        %v467 = vadd.f32 %v339, %v405
        %v468 = vadd.f32 %v340, %v405
        %v469 = vadd.f32 %v341, %v405
        %v470 = vadd.f32 %v342, %v405
        %v471 = vadd.f32 %v343, %v409
        %v472 = vadd.f32 %v344, %v409
        %v473 = vadd.f32 %v345, %v409
        %v474 = vadd.f32 %v346, %v409
        %v475 = vadd.f32 %v347, %v413
        %v476 = vadd.f32 %v348, %v413
        %v477 = vadd.f32 %v349, %v413
        %v478 = vadd.f32 %v350, %v413
        %v479 = vadd.f32 %v351, %v417
        %v480 = vadd.f32 %v352, %v417
        %v481 = vadd.f32 %v353, %v417
        %v482 = vadd.f32 %v354, %v417
        %v483 = vadd.f32 %v355, %v421
        %v484 = vadd.f32 %v356, %v421
        %v485 = vadd.f32 %v357, %v421
        %v486 = vadd.f32 %v358, %v421
        %v487 = vadd.f32 %v359, %v425
        %v488 = vadd.f32 %v360, %v425
        %v489 = vadd.f32 %v361, %v425
        %v490 = vadd.f32 %v362, %v425
        %v491 = vadd.f32 %v363, %v429
        %v492 = vadd.f32 %v364, %v429
        %v493 = vadd.f32 %v365, %v429
        %v494 = vadd.f32 %v366, %v429
        %v495 = vadd.f32 %v367, %v433
        %v496 = vadd.f32 %v368, %v433
        %v497 = vadd.f32 %v369, %v433
        %v498 = vadd.f32 %v370, %v433
        %v499 = vadd.f32 %v371, %v437
        %v500 = vadd.f32 %v372, %v437
        %v501 = vadd.f32 %v373, %v437
        %v502 = vadd.f32 %v374, %v437
        %v503 = vadd.f32 %v375, %v441
        %v504 = vadd.f32 %v376, %v441
        %v505 = vadd.f32 %v377, %v441
        %v506 = vadd.f32 %v378, %v441
        %v507 = vmax.f32 %v443, 0.0
        %v508 = vmax.f32 %v444, 0.0
        %v509 = vmax.f32 %v445, 0.0
        %v510 = vmax.f32 %v446, 0.0
        %v511 = vmax.f32 %v447, 0.0
        %v512 = vmax.f32 %v448, 0.0
        %v513 = vmax.f32 %v449, 0.0
        %v514 = vmax.f32 %v450, 0.0
        %v515 = vmax.f32 %v451, 0.0
        %v516 = vmax.f32 %v452, 0.0
        %v517 = vmax.f32 %v453, 0.0
        %v518 = vmax.f32 %v454, 0.0
        %v519 = vmax.f32 %v455, 0.0
        %v520 = vmax.f32 %v456, 0.0
        %v521 = vmax.f32 %v457, 0.0
        %v522 = vmax.f32 %v458, 0.0
        %v523 = vmax.f32 %v459, 0.0
        %v524 = vmax.f32 %v460, 0.0
        %v525 = vmax.f32 %v461, 0.0
        %v526 = vmax.f32 %v462, 0.0
        %v527 = vmax.f32 %v463, 0.0
        %v528 = vmax.f32 %v464, 0.0
        %v529 = vmax.f32 %v465, 0.0
        %v530 = vmax.f32 %v466, 0.0
        %v531 = vmax.f32 %v467, 0.0
        %v532 = vmax.f32 %v468, 0.0
        %v533 = vmax.f32 %v469, 0.0
        %v534 = vmax.f32 %v470, 0.0
        %v535 = vmax.f32 %v471, 0.0
        %v536 = vmax.f32 %v472, 0.0
        %v537 = vmax.f32 %v473, 0.0
        %v538 = vmax.f32 %v474, 0.0
        %v539 = vmax.f32 %v475, 0.0
        %v540 = vmax.f32 %v476, 0.0
        %v541 = vmax.f32 %v477, 0.0
        %v542 = vmax.f32 %v478, 0.0
        %v543 = vmax.f32 %v479, 0.0
        %v544 = vmax.f32 %v480, 0.0
        %v545 = vmax.f32 %v481, 0.0
        %v546 = vmax.f32 %v482, 0.0
        %v547 = vmax.f32 %v483, 0.0
        %v548 = vmax.f32 %v484, 0.0
        %v549 = vmax.f32 %v485, 0.0
        %v550 = vmax.f32 %v486, 0.0
        %v551 = vmax.f32 %v487, 0.0
        %v552 = vmax.f32 %v488, 0.0
        %v553 = vmax.f32 %v489, 0.0
        %v554 = vmax.f32 %v490, 0.0
        %v555 = vmax.f32 %v491, 0.0
        %v556 = vmax.f32 %v492, 0.0
        %v557 = vmax.f32 %v493, 0.0
        %v558 = vmax.f32 %v494, 0.0
        %v559 = vmax.f32 %v495, 0.0
        %v560 = vmax.f32 %v496, 0.0
        %v561 = vmax.f32 %v497, 0.0
        %v562 = vmax.f32 %v498, 0.0
        %v563 = vmax.f32 %v499, 0.0
        %v564 = vmax.f32 %v500, 0.0
        %v565 = vmax.f32 %v501, 0.0
        %v566 = vmax.f32 %v502, 0.0
        %v567 = vmax.f32 %v503, 0.0
        %v568 = vmax.f32 %v504, 0.0
        %v569 = vmax.f32 %v505, 0.0
        %v570 = vmax.f32 %v506, 0.0
        %v571 = vld [vmem:[%s2] sm:$0xff]
        %v572 = vld [vmem:[%s2 + $0x8] sm:$0xff]
        %v573 = vld [vmem:[%s2 + $0x10] sm:$0xff]
        %v574 = vld [vmem:[%s2 + $0x18] sm:$0xff]
        %v575 = vld [vmem:[%s2 + $0x20] sm:$0xff]
        %v576 = vld [vmem:[%s2 + $0x28] sm:$0xff]
        %v577 = vld [vmem:[%s2 + $0x30] sm:$0xff]
        %v578 = vld [vmem:[%s2 + $0x38] sm:$0xff]
        %v579 = vld [vmem:[%s2 + $0x40] sm:$0xff]
        %v580 = vld [vmem:[%s2 + $0x48] sm:$0xff]
        %v581 = vld [vmem:[%s2 + $0x50] sm:$0xff]
        %v582 = vld [vmem:[%s2 + $0x58] sm:$0xff]
        %v583 = vld [vmem:[%s2 + $0x60] sm:$0xff]
        %v584 = vld [vmem:[%s2 + $0x68] sm:$0xff]
        %v585 = vld [vmem:[%s2 + $0x70] sm:$0xff]
        %v586 = vld [vmem:[%s2 + $0x78] sm:$0xff]
        %587 = vset.pattern.permute.xlu0 2
        %588 = vperm.xlu0 %587, %v198
        %v589 = vpop.permute.xlu0 %588
        %591 = vset.pattern.permute.xlu0 2
        %592 = vperm.xlu0 %591, %v199
        %v593 = vpop.permute.xlu0 %592
        %595 = vset.pattern.permute.xlu0 2
        %596 = vperm.xlu0 %595, %v200
        %v597 = vpop.permute.xlu0 %596
        %599 = vset.pattern.permute.xlu0 2
        %600 = vperm.xlu0 %599, %v201
        %v601 = vpop.permute.xlu0 %600
        %603 = vset.pattern.permute.xlu0 2
        %604 = vperm.xlu0 %603, %v202
        %v605 = vpop.permute.xlu0 %604
        %607 = vset.pattern.permute.xlu0 2
        %608 = vperm.xlu0 %607, %v203
        %v609 = vpop.permute.xlu0 %608
        %611 = vset.pattern.permute.xlu0 2
        %612 = vperm.xlu0 %611, %v204
        %v613 = vpop.permute.xlu0 %612
        %615 = vset.pattern.permute.xlu0 2
        %616 = vperm.xlu0 %615, %v205
        %v617 = vpop.permute.xlu0 %616
        %619 = vset.pattern.permute.xlu0 2
        %620 = vperm.xlu0 %619, %v206
        %v621 = vpop.permute.xlu0 %620
        %623 = vset.pattern.permute.xlu0 2
        %624 = vperm.xlu0 %623, %v207
        %v625 = vpop.permute.xlu0 %624
        %627 = vset.pattern.permute.xlu0 2
        %628 = vperm.xlu0 %627, %v208
        %v629 = vpop.permute.xlu0 %628
        %631 = vset.pattern.permute.xlu0 2
        %632 = vperm.xlu0 %631, %v209
        %v633 = vpop.permute.xlu0 %632
        %635 = vset.pattern.permute.xlu0 2
        %636 = vperm.xlu0 %635, %v210
        %v637 = vpop.permute.xlu0 %636
        %639 = vset.pattern.permute.xlu0 2
        %640 = vperm.xlu0 %639, %v211
        %v641 = vpop.permute.xlu0 %640
        %643 = vset.pattern.permute.xlu0 2
        %644 = vperm.xlu0 %643, %v212
        %v645 = vpop.permute.xlu0 %644
        %647 = vset.pattern.permute.xlu0 2
        %648 = vperm.xlu0 %647, %v213
        %v649 = vpop.permute.xlu0 %648
        %651 = vmatprep.subr.mxu0 %v568
        %652 = vmatpush1.msra.mxu0 %v567
        %653 = vmatprep.subr.mxu0 %v564
        %654 = vmatpush1.msra.mxu0 %v563
        %655 = vmatprep.subr.mxu0 %v560
        %656 = vmatpush1.msra.mxu0 %v559
        %657 = vmatprep.subr.mxu0 %v556
        %658 = vmatpush1.msra.mxu0 %v555
        %659 = vmatprep.subr.mxu0 %v552
        %660 = vmatpush1.msra.mxu0 %v551
        %661 = vmatprep.subr.mxu0 %v548
        %662 = vmatpush1.msra.mxu0 %v547
        %663 = vmatprep.subr.mxu0 %v544
        %664 = vmatpush1.msra.mxu0 %v543
        %665 = vmatprep.subr.mxu0 %v540
        %666 = vmatpush1.msra.mxu0 %v539
        %667 = vmatprep.subr.mxu0 %v536
        %668 = vmatpush1.msra.mxu0 %v535
        %669 = vmatprep.subr.mxu0 %v532
        %670 = vmatpush1.msra.mxu0 %v531
        %671 = vmatprep.subr.mxu0 %v528
        %672 = vmatpush1.msra.mxu0 %v527
        %673 = vmatprep.subr.mxu0 %v524
        %674 = vmatpush1.msra.mxu0 %v523
        %675 = vmatprep.subr.mxu0 %v520
        %676 = vmatpush1.msra.mxu0 %v519
        %677 = vmatprep.subr.mxu0 %v516
        %678 = vmatpush1.msra.mxu0 %v515
        %679 = vmatprep.subr.mxu0 %v512
        %680 = vmatpush1.msra.mxu0 %v511
        %681 = vmatprep.subr.mxu0 %v508
        %682 = vmatpush1.msra.mxu0 %v507
        %683 = vmatprep.subr.mxu0 0.0
        %684 = vmatpush2.msra.mxu0 0.0
        %685 = vmatprep.subr.mxu0 0.0
        %686 = vmatpush2.msra.mxu0 0.0
        %687 = vmatprep.subr.mxu0 0.0
        %688 = vmatpush2.msra.mxu0 0.0
        %689 = vmatprep.subr.mxu0 0.0
        %690 = vmatpush2.msra.mxu0 0.0
        %691 = vmatprep.subr.mxu0 0.0
        %692 = vmatpush2.msra.mxu0 0.0
        %693 = vmatprep.subr.mxu0 0.0
        %694 = vmatpush2.msra.mxu0 0.0
        %695 = vmatprep.subr.mxu0 0.0
        %696 = vmatpush2.msra.mxu0 0.0
        %697 = vmatprep.subr.mxu0 0.0
        %698 = vmatpush2.msra.mxu0 0.0
        %699 = vmatprep.subr.mxu0 0.0
        %700 = vmatpush2.msra.mxu0 0.0
        %701 = vmatprep.subr.mxu0 0.0
        %702 = vmatpush2.msra.mxu0 0.0
        %703 = vmatprep.subr.mxu0 0.0
        %704 = vmatpush2.msra.mxu0 0.0
        %705 = vmatprep.subr.mxu0 0.0
        %706 = vmatpush2.msra.mxu0 0.0
        %707 = vmatprep.subr.mxu0 0.0
        %708 = vmatpush2.msra.mxu0 0.0
        %709 = vmatprep.subr.mxu0 0.0
        %710 = vmatpush2.msra.mxu0 0.0
        %711 = vmatprep.subr.mxu0 0.0
        %712 = vmatpush2.msra.mxu0 0.0
        %713 = vmatprep.subr.mxu0 0.0
        %714 = vmatpush2.msra.mxu0 0.0
        %715 = vmatprep.mubr.f32.mxu0 0.0
        %716 = vmatmul.mubr.f32.gmra.mxu0 %v571
        %v717 = vpop.f32.mrf.mxu0
        %v718 = vadd.f32 %v589, %v717
        %v719 = vpop.f32.mrf.mxu0
        %v720 = vadd.f32 %v589, %v719
        %721 = vmatprep.mubr.f32.mxu0 0.0
        %722 = vmatmul.mubr.f32.gmra.mxu0 %v572
        %v723 = vpop.f32.mrf.mxu0
        %v724 = vadd.f32 %v593, %v723
        %v725 = vpop.f32.mrf.mxu0
        %v726 = vadd.f32 %v593, %v725
        %727 = vmatprep.mubr.f32.mxu0 0.0
        %728 = vmatmul.mubr.f32.gmra.mxu0 %v573
        %v729 = vpop.f32.mrf.mxu0
        %v730 = vadd.f32 %v597, %v729
        %v731 = vpop.f32.mrf.mxu0
        %v732 = vadd.f32 %v597, %v731
        %733 = vmatprep.mubr.f32.mxu0 0.0
        %734 = vmatmul.mubr.f32.gmra.mxu0 %v574
        %v735 = vpop.f32.mrf.mxu0
        %v736 = vadd.f32 %v601, %v735
        %v737 = vpop.f32.mrf.mxu0
        %v738 = vadd.f32 %v601, %v737
        %739 = vmatprep.mubr.f32.mxu0 0.0
        %740 = vmatmul.mubr.f32.gmra.mxu0 %v575
        %v741 = vpop.f32.mrf.mxu0
        %v742 = vadd.f32 %v605, %v741
        %v743 = vpop.f32.mrf.mxu0
        %v744 = vadd.f32 %v605, %v743
        %745 = vmatprep.mubr.f32.mxu0 0.0
        %746 = vmatmul.mubr.f32.gmra.mxu0 %v576
        %v747 = vpop.f32.mrf.mxu0
        %v748 = vadd.f32 %v609, %v747
        %v749 = vpop.f32.mrf.mxu0
        %v750 = vadd.f32 %v609, %v749
        %751 = vmatprep.mubr.f32.mxu0 0.0
        %752 = vmatmul.mubr.f32.gmra.mxu0 %v577
        %v753 = vpop.f32.mrf.mxu0
        %v754 = vadd.f32 %v613, %v753
        %v755 = vpop.f32.mrf.mxu0
        %v756 = vadd.f32 %v613, %v755
        %757 = vmatprep.mubr.f32.mxu0 0.0
        %758 = vmatmul.mubr.f32.gmra.mxu0 %v578
        %v759 = vpop.f32.mrf.mxu0
        %v760 = vadd.f32 %v617, %v759
        %v761 = vpop.f32.mrf.mxu0
        %v762 = vadd.f32 %v617, %v761
        %763 = vmatprep.mubr.f32.mxu0 0.0
        %764 = vmatmul.mubr.f32.gmra.mxu0 %v579
        %v765 = vpop.f32.mrf.mxu0
        %v766 = vadd.f32 %v621, %v765
        %v767 = vpop.f32.mrf.mxu0
        %v768 = vadd.f32 %v621, %v767
        %769 = vmatprep.mubr.f32.mxu0 0.0
        %770 = vmatmul.mubr.f32.gmra.mxu0 %v580
        %v771 = vpop.f32.mrf.mxu0
        %v772 = vadd.f32 %v625, %v771
        %v773 = vpop.f32.mrf.mxu0
        %v774 = vadd.f32 %v625, %v773
        %775 = vmatprep.mubr.f32.mxu0 0.0
        %776 = vmatmul.mubr.f32.gmra.mxu0 %v581
        %v777 = vpop.f32.mrf.mxu0
        %v778 = vadd.f32 %v629, %v777
        %v779 = vpop.f32.mrf.mxu0
        %v780 = vadd.f32 %v629, %v779
        %781 = vmatprep.mubr.f32.mxu0 0.0
        %782 = vmatmul.mubr.f32.gmra.mxu0 %v582
        %v783 = vpop.f32.mrf.mxu0
        %v784 = vadd.f32 %v633, %v783
        %v785 = vpop.f32.mrf.mxu0
        %v786 = vadd.f32 %v633, %v785
        %787 = vmatprep.mubr.f32.mxu0 0.0
        %788 = vmatmul.mubr.f32.gmra.mxu0 %v583
        %v789 = vpop.f32.mrf.mxu0
        %v790 = vadd.f32 %v637, %v789
        %v791 = vpop.f32.mrf.mxu0
        %v792 = vadd.f32 %v637, %v791
        %793 = vmatprep.mubr.f32.mxu0 0.0
        %794 = vmatmul.mubr.f32.gmra.mxu0 %v584
        %v795 = vpop.f32.mrf.mxu0
        %v796 = vadd.f32 %v641, %v795
        %v797 = vpop.f32.mrf.mxu0
        %v798 = vadd.f32 %v641, %v797
        %799 = vmatprep.mubr.f32.mxu0 0.0
        %800 = vmatmul.mubr.f32.gmra.mxu0 %v585
        %v801 = vpop.f32.mrf.mxu0
        %v802 = vadd.f32 %v645, %v801
        %v803 = vpop.f32.mrf.mxu0
        %v804 = vadd.f32 %v645, %v803
        %805 = vmatprep.mubr.f32.mxu0 0.0
        %806 = vmatmul.mubr.f32.gmra.mxu0 %v586
        %v807 = vpop.f32.mrf.mxu0
        %v808 = vadd.f32 %v649, %v807
        %v809 = vpop.f32.mrf.mxu0
        %v810 = vadd.f32 %v649, %v809
        %811 = vdwg.mxu0
        %812 = vmatprep.subr.mxu0 %v570
        %813 = vmatpush1.msra.mxu0 %v569
        %814 = vmatprep.subr.mxu0 %v566
        %815 = vmatpush1.msra.mxu0 %v565
        %816 = vmatprep.subr.mxu0 %v562
        %817 = vmatpush1.msra.mxu0 %v561
        %818 = vmatprep.subr.mxu0 %v558
        %819 = vmatpush1.msra.mxu0 %v557
        %820 = vmatprep.subr.mxu0 %v554
        %821 = vmatpush1.msra.mxu0 %v553
        %822 = vmatprep.subr.mxu0 %v550
        %823 = vmatpush1.msra.mxu0 %v549
        %824 = vmatprep.subr.mxu0 %v546
        %825 = vmatpush1.msra.mxu0 %v545
        %826 = vmatprep.subr.mxu0 %v542
        %827 = vmatpush1.msra.mxu0 %v541
        %828 = vmatprep.subr.mxu0 %v538
        %829 = vmatpush1.msra.mxu0 %v537
        %830 = vmatprep.subr.mxu0 %v534
        %831 = vmatpush1.msra.mxu0 %v533
        %832 = vmatprep.subr.mxu0 %v530
        %833 = vmatpush1.msra.mxu0 %v529
        %834 = vmatprep.subr.mxu0 %v526
        %835 = vmatpush1.msra.mxu0 %v525
        %836 = vmatprep.subr.mxu0 %v522
        %837 = vmatpush1.msra.mxu0 %v521
        %838 = vmatprep.subr.mxu0 %v518
        %839 = vmatpush1.msra.mxu0 %v517
        %840 = vmatprep.subr.mxu0 %v514
        %841 = vmatpush1.msra.mxu0 %v513
        %842 = vmatprep.subr.mxu0 %v510
        %843 = vmatpush1.msra.mxu0 %v509
        %844 = vmatprep.subr.mxu0 0.0
        %845 = vmatpush2.msra.mxu0 0.0
        %846 = vmatprep.subr.mxu0 0.0
        %847 = vmatpush2.msra.mxu0 0.0
        %848 = vmatprep.subr.mxu0 0.0
        %849 = vmatpush2.msra.mxu0 0.0
        %850 = vmatprep.subr.mxu0 0.0
        %851 = vmatpush2.msra.mxu0 0.0
        %852 = vmatprep.subr.mxu0 0.0
        %853 = vmatpush2.msra.mxu0 0.0
        %854 = vmatprep.subr.mxu0 0.0
        %855 = vmatpush2.msra.mxu0 0.0
        %856 = vmatprep.subr.mxu0 0.0
        %857 = vmatpush2.msra.mxu0 0.0
        %858 = vmatprep.subr.mxu0 0.0
        %859 = vmatpush2.msra.mxu0 0.0
        %860 = vmatprep.subr.mxu0 0.0
        %861 = vmatpush2.msra.mxu0 0.0
        %862 = vmatprep.subr.mxu0 0.0
        %863 = vmatpush2.msra.mxu0 0.0
        %864 = vmatprep.subr.mxu0 0.0
        %865 = vmatpush2.msra.mxu0 0.0
        %866 = vmatprep.subr.mxu0 0.0
        %867 = vmatpush2.msra.mxu0 0.0
        %868 = vmatprep.subr.mxu0 0.0
        %869 = vmatpush2.msra.mxu0 0.0
        %870 = vmatprep.subr.mxu0 0.0
        %871 = vmatpush2.msra.mxu0 0.0
        %872 = vmatprep.subr.mxu0 0.0
        %873 = vmatpush2.msra.mxu0 0.0
        %874 = vmatprep.subr.mxu0 0.0
        %875 = vmatpush2.msra.mxu0 0.0
        %876 = vmatprep.mubr.f32.mxu0 0.0
        %877 = vmatmul.mubr.f32.gmra.mxu0 %v571
        %v878 = vpop.f32.mrf.mxu0
        %v879 = vadd.f32 %v589, %v878
        %v880 = vpop.f32.mrf.mxu0
        %v881 = vadd.f32 %v589, %v880
        %882 = vmatprep.mubr.f32.mxu0 0.0
        %883 = vmatmul.mubr.f32.gmra.mxu0 %v572
        %v884 = vpop.f32.mrf.mxu0
        %v885 = vadd.f32 %v593, %v884
        %v886 = vpop.f32.mrf.mxu0
        %v887 = vadd.f32 %v593, %v886
        %888 = vmatprep.mubr.f32.mxu0 0.0
        %889 = vmatmul.mubr.f32.gmra.mxu0 %v573
        %v890 = vpop.f32.mrf.mxu0
        %v891 = vadd.f32 %v597, %v890
        %v892 = vpop.f32.mrf.mxu0
        %v893 = vadd.f32 %v597, %v892
        %894 = vmatprep.mubr.f32.mxu0 0.0
        %895 = vmatmul.mubr.f32.gmra.mxu0 %v574
        %v896 = vpop.f32.mrf.mxu0
        %v897 = vadd.f32 %v601, %v896
        %v898 = vpop.f32.mrf.mxu0
        %v899 = vadd.f32 %v601, %v898
        %900 = vmatprep.mubr.f32.mxu0 0.0
        %901 = vmatmul.mubr.f32.gmra.mxu0 %v575
        %v902 = vpop.f32.mrf.mxu0
        %v903 = vadd.f32 %v605, %v902
        %v904 = vpop.f32.mrf.mxu0
        %v905 = vadd.f32 %v605, %v904
        %906 = vmatprep.mubr.f32.mxu0 0.0
        %907 = vmatmul.mubr.f32.gmra.mxu0 %v576
        %v908 = vpop.f32.mrf.mxu0
        %v909 = vadd.f32 %v609, %v908
        %v910 = vpop.f32.mrf.mxu0
        %v911 = vadd.f32 %v609, %v910
        %912 = vmatprep.mubr.f32.mxu0 0.0
        %913 = vmatmul.mubr.f32.gmra.mxu0 %v577
        %v914 = vpop.f32.mrf.mxu0
        %v915 = vadd.f32 %v613, %v914
        %v916 = vpop.f32.mrf.mxu0
        %v917 = vadd.f32 %v613, %v916
        %918 = vmatprep.mubr.f32.mxu0 0.0
        %919 = vmatmul.mubr.f32.gmra.mxu0 %v578
        %v920 = vpop.f32.mrf.mxu0
        %v921 = vadd.f32 %v617, %v920
        %v922 = vpop.f32.mrf.mxu0
        %v923 = vadd.f32 %v617, %v922
        %924 = vmatprep.mubr.f32.mxu0 0.0
        %925 = vmatmul.mubr.f32.gmra.mxu0 %v579
        %v926 = vpop.f32.mrf.mxu0
        %v927 = vadd.f32 %v621, %v926
        %v928 = vpop.f32.mrf.mxu0
        %v929 = vadd.f32 %v621, %v928
        %930 = vmatprep.mubr.f32.mxu0 0.0
        %931 = vmatmul.mubr.f32.gmra.mxu0 %v580
        %v932 = vpop.f32.mrf.mxu0
        %v933 = vadd.f32 %v625, %v932
        %v934 = vpop.f32.mrf.mxu0
        %v935 = vadd.f32 %v625, %v934
        %936 = vmatprep.mubr.f32.mxu0 0.0
        %937 = vmatmul.mubr.f32.gmra.mxu0 %v581
        %v938 = vpop.f32.mrf.mxu0
        %v939 = vadd.f32 %v629, %v938
        %v940 = vpop.f32.mrf.mxu0
        %v941 = vadd.f32 %v629, %v940
        %942 = vmatprep.mubr.f32.mxu0 0.0
        %943 = vmatmul.mubr.f32.gmra.mxu0 %v582
        %v944 = vpop.f32.mrf.mxu0
        %v945 = vadd.f32 %v633, %v944
        %v946 = vpop.f32.mrf.mxu0
        %v947 = vadd.f32 %v633, %v946
        %948 = vmatprep.mubr.f32.mxu0 0.0
        %949 = vmatmul.mubr.f32.gmra.mxu0 %v583
        %v950 = vpop.f32.mrf.mxu0
        %v951 = vadd.f32 %v637, %v950
        %v952 = vpop.f32.mrf.mxu0
        %v953 = vadd.f32 %v637, %v952
        %954 = vmatprep.mubr.f32.mxu0 0.0
        %955 = vmatmul.mubr.f32.gmra.mxu0 %v584
        %v956 = vpop.f32.mrf.mxu0
        %v957 = vadd.f32 %v641, %v956
        %v958 = vpop.f32.mrf.mxu0
        %v959 = vadd.f32 %v641, %v958
        %960 = vmatprep.mubr.f32.mxu0 0.0
        %961 = vmatmul.mubr.f32.gmra.mxu0 %v585
        %v962 = vpop.f32.mrf.mxu0
        %v963 = vadd.f32 %v645, %v962
        %v964 = vpop.f32.mrf.mxu0
        %v965 = vadd.f32 %v645, %v964
        %966 = vmatprep.mubr.f32.mxu0 0.0
        %967 = vmatmul.mubr.f32.gmra.mxu0 %v586
        %v968 = vpop.f32.mrf.mxu0
        %v969 = vadd.f32 %v649, %v968
        %v970 = vpop.f32.mrf.mxu0
        %v971 = vadd.f32 %v649, %v970
        %972 = vdwg.mxu0
        %v973 = vmax.f32 %v718, 0.0
        %v974 = vmax.f32 %v720, 0.0
        %v975 = vmax.f32 %v879, 0.0
        %v976 = vmax.f32 %v881, 0.0
        %v977 = vmax.f32 %v724, 0.0
        %v978 = vmax.f32 %v726, 0.0
        %v979 = vmax.f32 %v885, 0.0
        %v980 = vmax.f32 %v887, 0.0
        %v981 = vmax.f32 %v730, 0.0
        %v982 = vmax.f32 %v732, 0.0
        %v983 = vmax.f32 %v891, 0.0
        %v984 = vmax.f32 %v893, 0.0
        %v985 = vmax.f32 %v736, 0.0
        %v986 = vmax.f32 %v738, 0.0
        %v987 = vmax.f32 %v897, 0.0
        %v988 = vmax.f32 %v899, 0.0
        %v989 = vmax.f32 %v742, 0.0
        %v990 = vmax.f32 %v744, 0.0
        %v991 = vmax.f32 %v903, 0.0
        %v992 = vmax.f32 %v905, 0.0
        %v993 = vmax.f32 %v748, 0.0
        %v994 = vmax.f32 %v750, 0.0
        %v995 = vmax.f32 %v909, 0.0
        %v996 = vmax.f32 %v911, 0.0
        %v997 = vmax.f32 %v754, 0.0
        %v998 = vmax.f32 %v756, 0.0
        %v999 = vmax.f32 %v915, 0.0
        %v1000 = vmax.f32 %v917, 0.0
        %v1001 = vmax.f32 %v760, 0.0
        %v1002 = vmax.f32 %v762, 0.0
        %v1003 = vmax.f32 %v921, 0.0
        %v1004 = vmax.f32 %v923, 0.0
        %v1005 = vmax.f32 %v766, 0.0
        %v1006 = vmax.f32 %v768, 0.0
        %v1007 = vmax.f32 %v927, 0.0
        %v1008 = vmax.f32 %v929, 0.0
        %v1009 = vmax.f32 %v772, 0.0
        %v1010 = vmax.f32 %v774, 0.0
        %v1011 = vmax.f32 %v933, 0.0
        %v1012 = vmax.f32 %v935, 0.0
        %v1013 = vmax.f32 %v778, 0.0
        %v1014 = vmax.f32 %v780, 0.0
        %v1015 = vmax.f32 %v939, 0.0
        %v1016 = vmax.f32 %v941, 0.0
        %v1017 = vmax.f32 %v784, 0.0
        %v1018 = vmax.f32 %v786, 0.0
        %v1019 = vmax.f32 %v945, 0.0
        %v1020 = vmax.f32 %v947, 0.0
        %v1021 = vmax.f32 %v790, 0.0
        %v1022 = vmax.f32 %v792, 0.0
        %v1023 = vmax.f32 %v951, 0.0
        %v1024 = vmax.f32 %v953, 0.0
        %v1025 = vmax.f32 %v796, 0.0
        %v1026 = vmax.f32 %v798, 0.0
        %v1027 = vmax.f32 %v957, 0.0
        %v1028 = vmax.f32 %v959, 0.0
        %v1029 = vmax.f32 %v802, 0.0
        %v1030 = vmax.f32 %v804, 0.0
        %v1031 = vmax.f32 %v963, 0.0
        %v1032 = vmax.f32 %v965, 0.0
        %v1033 = vmax.f32 %v808, 0.0
        %v1034 = vmax.f32 %v810, 0.0
        %v1035 = vmax.f32 %v969, 0.0
        %v1036 = vmax.f32 %v971, 0.0
        %1037 = vset.pattern.permute.xlu0 3
        %1038 = vperm.xlu0 %1037, %v198
        %v1039 = vpop.permute.xlu0 %1038
        %1041 = vset.pattern.permute.xlu0 3
        %1042 = vperm.xlu0 %1041, %v199
        %v1043 = vpop.permute.xlu0 %1042
        %1045 = vset.pattern.permute.xlu0 3
        %1046 = vperm.xlu0 %1045, %v200
        %v1047 = vpop.permute.xlu0 %1046
        %1049 = vset.pattern.permute.xlu0 3
        %1050 = vperm.xlu0 %1049, %v201
        %v1051 = vpop.permute.xlu0 %1050
        %1053 = vset.pattern.permute.xlu0 3
        %1054 = vperm.xlu0 %1053, %v202
        %v1055 = vpop.permute.xlu0 %1054
        %1057 = vset.pattern.permute.xlu0 3
        %1058 = vperm.xlu0 %1057, %v203
        %v1059 = vpop.permute.xlu0 %1058
        %1061 = vset.pattern.permute.xlu0 3
        %1062 = vperm.xlu0 %1061, %v204
        %v1063 = vpop.permute.xlu0 %1062
        %1065 = vset.pattern.permute.xlu0 3
        %1066 = vperm.xlu0 %1065, %v205
        %v1067 = vpop.permute.xlu0 %1066
        %1069 = vset.pattern.permute.xlu0 3
        %1070 = vperm.xlu0 %1069, %v206
        %v1071 = vpop.permute.xlu0 %1070
        %1073 = vset.pattern.permute.xlu0 3
        %1074 = vperm.xlu0 %1073, %v207
        %v1075 = vpop.permute.xlu0 %1074
        %1077 = vset.pattern.permute.xlu0 3
        %1078 = vperm.xlu0 %1077, %v208
        %v1079 = vpop.permute.xlu0 %1078
        %1081 = vset.pattern.permute.xlu0 3
        %1082 = vperm.xlu0 %1081, %v209
        %v1083 = vpop.permute.xlu0 %1082
        %1085 = vset.pattern.permute.xlu0 3
        %1086 = vperm.xlu0 %1085, %v210
        %v1087 = vpop.permute.xlu0 %1086
        %1089 = vset.pattern.permute.xlu0 3
        %1090 = vperm.xlu0 %1089, %v211
        %v1091 = vpop.permute.xlu0 %1090
        %1093 = vset.pattern.permute.xlu0 3
        %1094 = vperm.xlu0 %1093, %v212
        %v1095 = vpop.permute.xlu0 %1094
        %1097 = vset.pattern.permute.xlu0 3
        %1098 = vperm.xlu0 %1097, %v213
        %v1099 = vpop.permute.xlu0 %1098
        %v1101 = vmul.f32 %v1039, %v973
        %v1102 = vmul.f32 %v1039, %v974
        %v1103 = vmul.f32 %v1039, %v975
        %v1104 = vmul.f32 %v1039, %v976
        %v1105 = vmul.f32 %v1043, %v977
        %v1106 = vmul.f32 %v1043, %v978
        %v1107 = vmul.f32 %v1043, %v979
        %v1108 = vmul.f32 %v1043, %v980
        %v1109 = vmul.f32 %v1047, %v981
        %v1110 = vmul.f32 %v1047, %v982
        %v1111 = vmul.f32 %v1047, %v983
        %v1112 = vmul.f32 %v1047, %v984
        %v1113 = vmul.f32 %v1051, %v985
        %v1114 = vmul.f32 %v1051, %v986
        %v1115 = vmul.f32 %v1051, %v987
        %v1116 = vmul.f32 %v1051, %v988
        %v1117 = vmul.f32 %v1055, %v989
        %v1118 = vmul.f32 %v1055, %v990
        %v1119 = vmul.f32 %v1055, %v991
        %v1120 = vmul.f32 %v1055, %v992
        %v1121 = vmul.f32 %v1059, %v993
        %v1122 = vmul.f32 %v1059, %v994
        %v1123 = vmul.f32 %v1059, %v995
        %v1124 = vmul.f32 %v1059, %v996
        %v1125 = vmul.f32 %v1063, %v997
        %v1126 = vmul.f32 %v1063, %v998
        %v1127 = vmul.f32 %v1063, %v999
        %v1128 = vmul.f32 %v1063, %v1000
        %v1129 = vmul.f32 %v1067, %v1001
        %v1130 = vmul.f32 %v1067, %v1002
        %v1131 = vmul.f32 %v1067, %v1003
        %v1132 = vmul.f32 %v1067, %v1004
        %v1133 = vmul.f32 %v1071, %v1005
        %v1134 = vmul.f32 %v1071, %v1006
        %v1135 = vmul.f32 %v1071, %v1007
        %v1136 = vmul.f32 %v1071, %v1008
        %v1137 = vmul.f32 %v1075, %v1009
        %v1138 = vmul.f32 %v1075, %v1010
        %v1139 = vmul.f32 %v1075, %v1011
        %v1140 = vmul.f32 %v1075, %v1012
        %v1141 = vmul.f32 %v1079, %v1013
        %v1142 = vmul.f32 %v1079, %v1014
        %v1143 = vmul.f32 %v1079, %v1015
        %v1144 = vmul.f32 %v1079, %v1016
        %v1145 = vmul.f32 %v1083, %v1017
        %v1146 = vmul.f32 %v1083, %v1018
        %v1147 = vmul.f32 %v1083, %v1019
        %v1148 = vmul.f32 %v1083, %v1020
        %v1149 = vmul.f32 %v1087, %v1021
        %v1150 = vmul.f32 %v1087, %v1022
        %v1151 = vmul.f32 %v1087, %v1023
        %v1152 = vmul.f32 %v1087, %v1024
        %v1153 = vmul.f32 %v1091, %v1025
        %v1154 = vmul.f32 %v1091, %v1026
        %v1155 = vmul.f32 %v1091, %v1027
        %v1156 = vmul.f32 %v1091, %v1028
        %v1157 = vmul.f32 %v1095, %v1029
        %v1158 = vmul.f32 %v1095, %v1030
        %v1159 = vmul.f32 %v1095, %v1031
        %v1160 = vmul.f32 %v1095, %v1032
        %v1161 = vmul.f32 %v1099, %v1033
        %v1162 = vmul.f32 %v1099, %v1034
        %v1163 = vmul.f32 %v1099, %v1035
        %v1164 = vmul.f32 %v1099, %v1036
        %v1165 = vadd.f32 %v1101, %v1105
        %v1166 = vadd.f32 %v1165, %v1109
        %v1167 = vadd.f32 %v1166, %v1113
        %v1168 = vadd.f32 %v1167, %v1117
        %v1169 = vadd.f32 %v1168, %v1121
        %v1170 = vadd.f32 %v1169, %v1125
        %v1171 = vadd.f32 %v1170, %v1129
        %v1172 = vadd.f32 %v1171, %v1133
        %v1173 = vadd.f32 %v1172, %v1137
        %v1174 = vadd.f32 %v1173, %v1141
        %v1175 = vadd.f32 %v1174, %v1145
        %v1176 = vadd.f32 %v1175, %v1149
        %v1177 = vadd.f32 %v1176, %v1153
        %v1178 = vadd.f32 %v1177, %v1157
        %v1179 = vadd.f32 %v1178, %v1161
        %v1180 = vrot.slane %v1179, 4
        %v1181 = vadd.f32 %v1179, %v1180
        %v1182 = vrot.slane %v1181, 2
        %v1183 = vadd.f32 %v1181, %v1182
        %v1184 = vrot.slane %v1183, 1
        %v1185 = vadd.f32 %v1183, %v1184
        %v1186 = vadd.f32 %v1102, %v1106
        %v1187 = vadd.f32 %v1186, %v1110
        %v1188 = vadd.f32 %v1187, %v1114
        %v1189 = vadd.f32 %v1188, %v1118
        %v1190 = vadd.f32 %v1189, %v1122
        %v1191 = vadd.f32 %v1190, %v1126
        %v1192 = vadd.f32 %v1191, %v1130
        %v1193 = vadd.f32 %v1192, %v1134
        %v1194 = vadd.f32 %v1193, %v1138
        %v1195 = vadd.f32 %v1194, %v1142
        %v1196 = vadd.f32 %v1195, %v1146
        %v1197 = vadd.f32 %v1196, %v1150
        %v1198 = vadd.f32 %v1197, %v1154
        %v1199 = vadd.f32 %v1198, %v1158
        %v1200 = vadd.f32 %v1199, %v1162
        %v1201 = vrot.slane %v1200, 4
        %v1202 = vadd.f32 %v1200, %v1201
        %v1203 = vrot.slane %v1202, 2
        %v1204 = vadd.f32 %v1202, %v1203
        %v1205 = vrot.slane %v1204, 1
        %v1206 = vadd.f32 %v1204, %v1205
        %v1207 = vadd.f32 %v1103, %v1107
        %v1208 = vadd.f32 %v1207, %v1111
        %v1209 = vadd.f32 %v1208, %v1115
        %v1210 = vadd.f32 %v1209, %v1119
        %v1211 = vadd.f32 %v1210, %v1123
        %v1212 = vadd.f32 %v1211, %v1127
        %v1213 = vadd.f32 %v1212, %v1131
        %v1214 = vadd.f32 %v1213, %v1135
        %v1215 = vadd.f32 %v1214, %v1139
        %v1216 = vadd.f32 %v1215, %v1143
        %v1217 = vadd.f32 %v1216, %v1147
        %v1218 = vadd.f32 %v1217, %v1151
        %v1219 = vadd.f32 %v1218, %v1155
        %v1220 = vadd.f32 %v1219, %v1159
        %v1221 = vadd.f32 %v1220, %v1163
        %v1222 = vrot.slane %v1221, 4
        %v1223 = vadd.f32 %v1221, %v1222
        %v1224 = vrot.slane %v1223, 2
        %v1225 = vadd.f32 %v1223, %v1224
        %v1226 = vrot.slane %v1225, 1
        %v1227 = vadd.f32 %v1225, %v1226
        %v1228 = vadd.f32 %v1104, %v1108
        %v1229 = vadd.f32 %v1228, %v1112
        %v1230 = vadd.f32 %v1229, %v1116
        %v1231 = vadd.f32 %v1230, %v1120
        %v1232 = vadd.f32 %v1231, %v1124
        %v1233 = vadd.f32 %v1232, %v1128
        %v1234 = vadd.f32 %v1233, %v1132
        %v1235 = vadd.f32 %v1234, %v1136
        %v1236 = vadd.f32 %v1235, %v1140
        %v1237 = vadd.f32 %v1236, %v1144
        %v1238 = vadd.f32 %v1237, %v1148
        %v1239 = vadd.f32 %v1238, %v1152
        %v1240 = vadd.f32 %v1239, %v1156
        %v1241 = vadd.f32 %v1240, %v1160
        %v1242 = vadd.f32 %v1241, %v1164
        %v1243 = vrot.slane %v1242, 4
        %v1244 = vadd.f32 %v1242, %v1243
        %v1245 = vrot.slane %v1244, 2
        %v1246 = vadd.f32 %v1244, %v1245
        %v1247 = vrot.slane %v1246, 1
        %v1248 = vadd.f32 %v1246, %v1247
        %s1249 = sld [smem:[#allocation2]]
        %v1250 = vstv %s1249
        %v1251 = vadd.f32 %v1185, %v1250
        %v1252 = vadd.f32 %v1206, %v1250
        %v1253 = vadd.f32 %v1227, %v1250
        %v1254 = vadd.f32 %v1248, %v1250
        %v1259 = vcombine.low %v1251, %v1252
        %v1260 = vcombine.low %v1253, %v1254
        %v1262 = vunpack.c.l.s4 1966171168
        %v1263 = vunpack.c.0.s8 %v1262
        %v1264 = vlaneseq
        %v1265 = vshrl.u32 %v1264, 7
        %v1266 = vsub.s32 %v1263, %v1265
        %v1267 = vrot.slane %v1259, %v1266
        %v1269 = vunpack.c.l.s4 1966171168
        %v1270 = vunpack.c.0.s8 %v1269
        %v1271 = vlaneseq
        %v1272 = vshrl.u32 %v1271, 7
        %v1273 = vsub.s32 %v1270, %v1272
        %v1274 = vrot.slane %v1260, %v1273
        %v1275 = vcombine.low %v1267, %v1274
        %v1277 = vunpack.c.l.s4 1966171168
        %v1278 = vunpack.c.0.s8 %v1277
        %v1279 = vlaneseq
        %v1280 = vshrl.u32 %v1279, 7
        %v1281 = vsub.s32 %v1278, %v1280
        %v1282 = vrot.slane %v1275, %v1281
        %v1284 = vlaneseq
        %vm1285 = vcmp.ge.s32.totalorder %v1284, 0
        %vm1286 = vcmp.lt.s32.totalorder %v1284, 512
        %vm1287 = vmand %vm1285, %vm1286
        %1288 = vst.msk [vmem:[%s190] sm:$0xf] %vm1287, %v1282
        %s1289 = sand.u32 %s116, 1
        %s1290 = scalar_lea.sflag [#allocation4], %s1289
        %s1291 = sand.u32 %s116, 1
        %s1292 = smul.addr %s1291, 4
        %s1293 = scalar_lea.vmem [#allocation3], %s1292
        // Predicated region
        $region37: #{tpu_custom_call.1} parent=35 // pred_check
          %p1294 = pneg %p126
        $region38: #{tpu_custom_call.1} parent=35 // pred_check_branch
          %1296 = sbr.rel (%p1294) target = $region40
        $region39: #{tpu_custom_call.1} parent=35 // pred_region
          %s1297 = smul.u32 4, %s19
          %s1299 = ssub.s32 64, 64
          %1300 = vsyncadd %s1290, %s1299
          %s1301 = smul.addr %s1297, 16
          %s1302 = scalar_lea.hbm %s4, %s1301
          %s1304 = sshll.u32 %s1293, 4
          %s1305 = int_to_ptr.vmem [resolvable:$true] %s1304
          %1307 = dma.vmem_to_hbm [thread:$0]  %s1305, 64, %s1302, %s1290
        $region40: #{tpu_custom_call.1} parent=35 // pred_fallthru
          _
      $region36: #{tpu_custom_call.1} parent=5 // pred_fallthru
        _
      %p1308 = scmp.le.s32.totalorder 2, %s14
      // Predicated region
      $region41: #{tpu_custom_call.1} parent=5 // pred_check
        %p1309 = pneg %p1308
      $region42: #{tpu_custom_call.1} parent=5 // pred_check_branch
        %1311 = sbr.rel (%p1309) target = $region44
      $region43: #{tpu_custom_call.1} parent=5 // pred_region
        %s1312 = ssub.s32 %s14, 2
        // Predicated region
        $region45: #{tpu_custom_call.1} parent=43 // pred_check
          %p1313 = pneg %p132
        $region46: #{tpu_custom_call.1} parent=43 // pred_check_branch
          %1315 = sbr.rel (%p1313) target = $region48
        $region47: #{tpu_custom_call.1} parent=43 // pred_region
          %s1316 = sand.u32 %s117, 1
          %s1317 = scalar_lea.sflag [#allocation4], %s1316
          %s1318 = sand.u32 %s117, 1
          %s1319 = smul.addr %s1318, 4
          %s1320 = scalar_lea.vmem [#allocation3], %s1319
          %1321 = dma.done %s1317, 64
        $region48: #{tpu_custom_call.1} parent=43 // pred_fallthru
          _
      $region44: #{tpu_custom_call.1} parent=5 // pred_fallthru
        _
    $region6: #{tpu_custom_call.1} parent=1 // loop_footer
      %s18 = sadd.s32 1, %s14
    $region7: #{tpu_custom_call.1} parent=1 // loop_footer_branch
      %13 = sbr.rel target = $region3
    $region8: #{tpu_custom_call.1} parent=1 // loop_exit
      _
    %1322 = vsyncpa [#allocation4], 1
    %s1323 = scalar_lea.sflag [#allocation4], 1
    %1324 = vsyncpa %s1323, 1

</llo_original>
